<compile_context>
chip_gen: v7x
topology: tpu7x:2x2x1
jax: 0.10.0
libtpu: 0.0.40
codegen_flags: <defaults>
</compile_context>

<pallas_src>
import numpy as np
import jax
import jax.numpy as jnp
from jax import lax
from jax.experimental import pallas as pl
from jax.experimental.pallas import tpu as pltpu

SCALING = 10 ** (-10 / 20)
PAD = 128  # lane-padded feature width used throughout (mel / hidden / codes)

CONF = dict(
    fs=16000,
    winsize=128,
    hopsize=64,
    num_mels=80,
    fmin=0.0,
    fmax=8000.0,
    mel_pad_left=32,
    h_dim=64,
    z_dim=32,
    voc_hidden=128,
)


def _round_up(x, m):
    return (x + m - 1) // m * m


# ----------------------------------------------------------------------------
# Pallas kernels
# ----------------------------------------------------------------------------
def _mel_xproj_kernel(frames_ref, win_ref, dft_ref, melfb_ref, wxh_ref, bh_ref,
                      out_ref):
    # frames: (R, W)  window: (1, W)  dft: (W, 2*PAD) [cos | -sin, zero-padded]
    # melfb: (PAD, PAD)  wxh: (PAD, PAD)  bh: (1, PAD)  -> out: (R, PAD)
    fr = (frames_ref[...] * win_ref[...]).astype(jnp.bfloat16)
    spec = jnp.dot(fr, dft_ref[...], preferred_element_type=jnp.float32)
    re = spec[:, :PAD]
    im = spec[:, PAD:]
    power = (re * re + im * im).astype(jnp.bfloat16)
    mel = jnp.dot(power, melfb_ref[...], preferred_element_type=jnp.float32)
    logmel = jnp.log(jnp.maximum(mel, 1e-5)).astype(jnp.bfloat16)
    out_ref[...] = (jnp.dot(logmel, wxh_ref[...],
                            preferred_element_type=jnp.float32) + bh_ref[...])


def _make_encode_kernel(tc, bp):
    def kernel(bits_ref, xproj_ref, whh_ref, whz_ref, bz_ref,
               codes_ref, h_scr, hall_scr):
        @pl.when(pl.program_id(0) == 0)
        def _():
            h_scr[...] = jnp.zeros_like(h_scr)

        # serial recurrence over the chunk (only h @ Whh stays inside the loop)
        def step(i, h):
            off = pl.multiple_of(i * bp, bp)
            x_t = xproj_ref[pl.ds(off, bp), :]
            h_new = jnp.tanh(x_t + jnp.dot(h, whh_ref[...],
                                           preferred_element_type=jnp.float32))
            hall_scr[pl.ds(off, bp), :] = h_new
            return h_new

        h_scr[...] = lax.fori_loop(0, tc, step, h_scr[...])

        # batched readout + variable-bitrate binarization over the whole chunk
        logits = (jnp.dot(hall_scr[...], whz_ref[...],
                          preferred_element_type=jnp.float32) + bz_ref[...])
        pos = lax.broadcasted_iota(jnp.int32, logits.shape, 1)
        active = pos < bits_ref[0]
        codes_ref[...] = jnp.where(active,
                                   (logits > 0.0).astype(jnp.float32), 0.0)
    return kernel


def _make_decode_voc_kernel(tc, bp):
    def kernel(codes_ref, wzh_ref, bh_ref, whh_ref, w1_ref, b1_ref, w2_ref,
               b2_ref, out_ref, h_scr, cproj_scr, hall_scr):
        @pl.when(pl.program_id(0) == 0)
        def _():
            h_scr[...] = jnp.zeros_like(h_scr)

        # hoisted input projection: all timesteps of the chunk at once
        cproj_scr[...] = (jnp.dot(codes_ref[...], wzh_ref[...],
                                  preferred_element_type=jnp.float32)
                          + bh_ref[...])

        def step(i, h):
            off = pl.multiple_of(i * bp, bp)
            h_new = jnp.tanh(cproj_scr[pl.ds(off, bp), :]
                             + jnp.dot(h, whh_ref[...],
                                       preferred_element_type=jnp.float32))
            hall_scr[pl.ds(off, bp), :] = h_new
            return h_new

        h_scr[...] = lax.fori_loop(0, tc, step, h_scr[...])

        # fused (linear mel readout . vocoder layer-1), then vocoder layer-2
        a1 = jnp.tanh(jnp.dot(hall_scr[...].astype(jnp.bfloat16), w1_ref[...],
                              preferred_element_type=jnp.float32) + b1_ref[...])
        out_ref[...] = jnp.tanh(jnp.dot(a1.astype(jnp.bfloat16), w2_ref[...],
                                        preferred_element_type=jnp.float32)
                                + b2_ref[...])
    return kernel


# ----------------------------------------------------------------------------
# pallas_call wrappers
# ----------------------------------------------------------------------------
def mel_xproj_pallas(frames, window, dft, melfb, wxh, bh, *, tile_rows):
    R, W = frames.shape
    assert R % tile_rows == 0
    return pl.pallas_call(
        _mel_xproj_kernel,
        out_shape=jax.ShapeDtypeStruct((R, PAD), jnp.float32),
        grid=(R // tile_rows,),
        in_specs=[
            pl.BlockSpec((tile_rows, W), lambda i: (i, 0)),
            pl.BlockSpec((1, W), lambda i: (0, 0)),
            pl.BlockSpec((W, 2 * PAD), lambda i: (0, 0)),
            pl.BlockSpec((PAD, PAD), lambda i: (0, 0)),
            pl.BlockSpec((PAD, PAD), lambda i: (0, 0)),
            pl.BlockSpec((1, PAD), lambda i: (0, 0)),
        ],
        out_specs=pl.BlockSpec((tile_rows, PAD), lambda i: (i, 0)),
        compiler_params=pltpu.CompilerParams(
            dimension_semantics=("parallel",)),
    )(frames, window, dft, melfb, wxh, bh)


def bvrnn_encode_pallas(xproj, bits, whh, whz, bz, *, tc, bp):
    R, _ = xproj.shape
    rows = tc * bp
    assert R % rows == 0
    return pl.pallas_call(
        _make_encode_kernel(tc, bp),
        out_shape=jax.ShapeDtypeStruct((R, PAD), jnp.float32),
        grid_spec=pltpu.PrefetchScalarGridSpec(
            num_scalar_prefetch=1,
            grid=(R // rows,),
            in_specs=[
                pl.BlockSpec((rows, PAD), lambda c, b: (c, 0)),
                pl.BlockSpec((PAD, PAD), lambda c, b: (0, 0)),
                pl.BlockSpec((PAD, PAD), lambda c, b: (0, 0)),
                pl.BlockSpec((1, PAD), lambda c, b: (0, 0)),
            ],
            out_specs=pl.BlockSpec((rows, PAD), lambda c, b: (c, 0)),
            scratch_shapes=[pltpu.VMEM((bp, PAD), jnp.float32),
                            pltpu.VMEM((rows, PAD), jnp.float32)],
        ),
        compiler_params=pltpu.CompilerParams(
            dimension_semantics=("arbitrary",)),
    )(bits, xproj, whh, whz, bz)


def bvrnn_decode_voc_pallas(codes, wzh, bh, whh, w1f, b1f, w2, b2, *, tc, bp):
    R, Z = codes.shape
    hop = w2.shape[1]
    rows = tc * bp
    assert R % rows == 0
    return pl.pallas_call(
        _make_decode_voc_kernel(tc, bp),
        out_shape=jax.ShapeDtypeStruct((R, hop), jnp.float32),
        grid=(R // rows,),
        in_specs=[
            pl.BlockSpec((rows, Z), lambda c: (c, 0)),
            pl.BlockSpec((Z, PAD), lambda c: (0, 0)),
            pl.BlockSpec((1, PAD), lambda c: (0, 0)),
            pl.BlockSpec((PAD, PAD), lambda c: (0, 0)),
            pl.BlockSpec((PAD, PAD), lambda c: (0, 0)),
            pl.BlockSpec((1, PAD), lambda c: (0, 0)),
            pl.BlockSpec((PAD, hop), lambda c: (0, 0)),
            pl.BlockSpec((1, hop), lambda c: (0, 0)),
        ],
        out_specs=pl.BlockSpec((rows, hop), lambda c: (c, 0)),
        scratch_shapes=[pltpu.VMEM((bp, PAD), jnp.float32),
                        pltpu.VMEM((rows, PAD), jnp.float32),
                        pltpu.VMEM((rows, PAD), jnp.float32)],
        compiler_params=pltpu.CompilerParams(
            dimension_semantics=("arbitrary",)),
    )(codes, wzh, bh, whh, w1f, b1f, w2, b2)


# ----------------------------------------------------------------------------
# deterministic parameter / constant construction (replaces checkpoint load)
# ----------------------------------------------------------------------------
def make_mel_filterbank(num_mels, n_fft, fs, fmin, fmax):
    n_freqs = n_fft // 2 + 1
    freqs = np.linspace(0.0, fs / 2.0, n_freqs)

    def hz_to_mel(f):
        return 2595.0 * np.log10(1.0 + f / 700.0)

    def mel_to_hz(m):
        return 700.0 * (10.0 ** (m / 2595.0) - 1.0)

    mel_pts = np.linspace(hz_to_mel(fmin), hz_to_mel(fmax), num_mels + 2)
    hz_pts = mel_to_hz(mel_pts)
    fb = np.zeros((n_freqs, num_mels), dtype=np.float32)
    for m in range(num_mels):
        left, center, right = hz_pts[m], hz_pts[m + 1], hz_pts[m + 2]
        up = (freqs - left) / max(center - left, 1e-8)
        down = (right - freqs) / max(right - center, 1e-8)
        fb[:, m] = np.maximum(0.0, np.minimum(up, down))
    return fb


def make_params(key):
    W = CONF["winsize"]
    F = W // 2 + 1
    M = CONF["num_mels"]
    H = CONF["h_dim"]
    Z = CONF["z_dim"]
    Hv = CONF["voc_hidden"]
    hop = CONF["hopsize"]

    # packed DFT matrix:  cols [0:F) = cos, cols [PAD:PAD+F) = -sin, rest zero
    n = np.arange(W)[:, None]
    k = np.arange(F)[None, :]
    ang = 2.0 * np.pi * n * k / W
    dft = np.zeros((W, 2 * PAD), np.float32)
    dft[:, :F] = np.cos(ang)
    dft[:, PAD:PAD + F] = -np.sin(ang)
    window = (0.5 - 0.5 * np.cos(2.0 * np.pi * np.arange(W) / W)).astype(np.float32)

    melfb = np.zeros((PAD, PAD), np.float32)
    melfb[:F, :M] = make_mel_filterbank(M, W, CONF["fs"], CONF["fmin"], CONF["fmax"])

    def init(k_, shape, fan_in):
        return jax.random.normal(k_, shape, jnp.float32) / np.sqrt(fan_in)

    def padded(w, rows, cols):
        out = jnp.zeros((rows, cols), jnp.float32)
        return out.at[:w.shape[0], :w.shape[1]].set(w)

    keys = jax.random.split(key, 8)
    enc_wxh = padded(init(keys[0], (M, H), M), PAD, PAD)
    enc_whh = padded(init(keys[1], (H, H), H), PAD, PAD)
    enc_whz = padded(init(keys[2], (H, Z), H), PAD, PAD)
    dec_wzh = padded(init(keys[3], (Z, H), Z), Z, PAD)
    dec_whh = padded(init(keys[4], (H, H), H), PAD, PAD)
    dec_whx = init(keys[5], (H, M), H)               # (64, 80) mel readout
    voc_w1 = init(keys[6], (M, Hv), M)               # (80, 128)
    voc_w2 = init(keys[7], (Hv, hop), Hv)            # (128, 64)

    dec_bx = jnp.zeros((1, M), jnp.float32)
    voc_b1 = jnp.zeros((1, Hv), jnp.float32)
    voc_b2 = jnp.zeros((1, hop), jnp.float32)

    # fold the (linear) decoder mel readout into the vocoder first layer
    voc_w1f = padded(jnp.dot(dec_whx, voc_w1), PAD, Hv)   # (128, 128)
    voc_b1f = jnp.dot(dec_bx, voc_w1) + voc_b1            # (1, 128)

    return dict(
        window=jnp.asarray(window)[None, :],                       # (1,128) f32
        dft=jnp.asarray(dft).astype(jnp.bfloat16),                 # (128,256)
        melfb=jnp.asarray(melfb).astype(jnp.bfloat16),             # (128,128)
        enc_wxh=enc_wxh.astype(jnp.bfloat16),                      # (128,128)
        enc_bh=jnp.zeros((1, PAD), jnp.float32),
        enc_whh=enc_whh,                                           # f32
        enc_whz=enc_whz,                                           # f32
        enc_bz=jnp.zeros((1, PAD), jnp.float32),
        dec_wzh=dec_wzh,                                           # (32,128) f32
        dec_bh=jnp.zeros((1, PAD), jnp.float32),
        dec_whh=dec_whh,                                           # f32
        voc_w1f=voc_w1f.astype(jnp.bfloat16),                      # (128,128)
        voc_b1f=voc_b1f,                                           # (1,128) f32
        voc_w2=voc_w2.astype(jnp.bfloat16),                        # (128,64)
        voc_b2=voc_b2,                                             # (1,64) f32
    )


# ----------------------------------------------------------------------------
# model wrapper mirroring BVRNNCodecModel.encode / .decode / .forward
# ----------------------------------------------------------------------------
class BVRNNCodecModelPallas:
    def __init__(self, params):
        self.p = params

    @staticmethod
    def _time_tiling(T, B):
        bp = _round_up(max(B, 1), 8)          # sublane-padded batch
        tc = min(128, _round_up(T, 8))        # timesteps per chunk
        tpad = _round_up(T, tc)
        return tc, tpad, bp

    def encode(self, x, bitrate):
        B, L = x.shape
        hop, win, fs = CONF["hopsize"], CONF["winsize"], CONF["fs"]
        T = -(-L // hop)
        tc, tpad, bp = self._time_tiling(T, B)

        xs = x * SCALING
        pad_left = CONF["mel_pad_left"]
        pad_total = (T - 1) * hop + win - L
        assert pad_total >= pad_left, (pad_total, pad_left)
        pad_right = pad_total - pad_left
        xp = jnp.pad(xs, ((0, bp - B), (pad_left, pad_right)))

        idx = jnp.asarray(np.arange(T)[:, None] * hop + np.arange(win)[None, :])
        frames = xp[:, idx]                          # (bp, T, win)
        frames = jnp.transpose(frames, (1, 0, 2))    # time-major (T, bp, win)
        frames = jnp.pad(frames, ((0, tpad - T), (0, 0), (0, 0)))
        frames_flat = frames.reshape(tpad * bp, win)

        p = self.p
        # fused mel analysis + BVRNN input projection, tiled & pipelined
        xproj = mel_xproj_pallas(frames_flat, p["window"], p["dft"], p["melfb"],
                                 p["enc_wxh"], p["enc_bh"], tile_rows=tc * bp)

        bits_val = int(np.round(bitrate * hop / fs))
        bits = jnp.array([bits_val], jnp.int32)
        codes_flat = bvrnn_encode_pallas(xproj, bits, p["enc_whh"],
                                         p["enc_whz"], p["enc_bz"],
                                         tc=tc, bp=bp)                 # (tpad*bp, 128)
        codes = codes_flat.reshape(tpad, bp, PAD)[:T, :B, :CONF["z_dim"]]
        return jnp.transpose(codes, (1, 0, 2))                         # (B, T, Z)

    def decode(self, codes, length):
        B, T, Z = codes.shape
        hop = CONF["hopsize"]
        tc, tpad, bp = self._time_tiling(T, B)

        codes_tm = jnp.transpose(codes, (1, 0, 2))                     # (T, B, Z)
        codes_tm = jnp.pad(codes_tm, ((0, tpad - T), (0, bp - B), (0, 0)))
        codes_flat = codes_tm.reshape(tpad * bp, Z)

        p = self.p
        frames_out = bvrnn_decode_voc_pallas(
            codes_flat, p["dec_wzh"], p["dec_bh"], p["dec_whh"],
            p["voc_w1f"], p["voc_b1f"], p["voc_w2"], p["voc_b2"],
            tc=tc, bp=bp)                                              # (tpad*bp, hop)

        wav = frames_out.reshape(tpad, bp, hop)[:T, :B, :]
        wav = jnp.transpose(wav, (1, 0, 2)).reshape(B, T * hop)
        if length > T * hop:
            wav = jnp.pad(wav, ((0, 0), (0, length - T * hop)))
        return wav[:, :length] / SCALING

    def forward(self, x, bitrate):
        length = x.shape[1]
        codes = self.encode(x, bitrate)
        return self.decode(codes, length)


# ----------------------------------------------------------------------------
if __name__ == "__main__":
    key = jax.random.PRNGKey(0)
    pkey, xkey = jax.random.split(key)

    params = make_params(pkey)
    model = BVRNNCodecModelPallas(params)

    B, L = 2, 512
    x = jax.random.normal(xkey, (B, L), jnp.float32)
    bitrate = 6000.0

    y = model.forward(x, bitrate)
    y = jax.block_until_ready(y)

    assert y.shape == (B, L), y.shape
    assert bool(jnp.all(jnp.isfinite(y)))
    print("KERNEL_OK")
</pallas_src>

<mosaic_0001>
module attributes {stable_mosaic.version = 11 : i64} {
  func.func @_mel_xproj_kernel(%arg0: i32, %arg1: memref<64x128xf32, #tpu.memory_space<vmem>>, %arg2: memref<1x128xf32, #tpu.memory_space<vmem>>, %arg3: memref<128x256xbf16, #tpu.memory_space<vmem>>, %arg4: memref<128x128xbf16, #tpu.memory_space<vmem>>, %arg5: memref<128x128xbf16, #tpu.memory_space<vmem>>, %arg6: memref<1x128xf32, #tpu.memory_space<vmem>>, %arg7: memref<64x128xf32, #tpu.memory_space<vmem>>) attributes {dimension_semantics = [#tpu.dimension_semantics<parallel>], iteration_bounds = array<i64: 1>, scalar_prefetch = 0 : i64, scratch_operands = 0 : i64, tpu.core_type = #tpu.core_type<tc>, window_params = [{transform_indices = @transform_0, window_bounds = array<i64: 64, 128>}, {pipeline_mode = #tpu.pipeline_mode<synchronous>, transform_indices = @transform_1, window_bounds = array<i64: 1, 128>}, {pipeline_mode = #tpu.pipeline_mode<synchronous>, transform_indices = @transform_2, window_bounds = array<i64: 128, 256>}, {pipeline_mode = #tpu.pipeline_mode<synchronous>, transform_indices = @transform_3, window_bounds = array<i64: 128, 128>}, {pipeline_mode = #tpu.pipeline_mode<synchronous>, transform_indices = @transform_4, window_bounds = array<i64: 128, 128>}, {pipeline_mode = #tpu.pipeline_mode<synchronous>, transform_indices = @transform_5, window_bounds = array<i64: 1, 128>}, {transform_indices = @transform_6, window_bounds = array<i64: 64, 128>}]} {
    %c0 = arith.constant 0 : index
    %c0_0 = arith.constant 0 : index
    %0 = vector.load %arg1[%c0, %c0_0] : memref<64x128xf32, #tpu.memory_space<vmem>>, vector<64x128xf32>
    %c0_1 = arith.constant 0 : index
    %c0_2 = arith.constant 0 : index
    %1 = vector.load %arg2[%c0_1, %c0_2] : memref<1x128xf32, #tpu.memory_space<vmem>>, vector<1x128xf32>
    %2 = vector.broadcast %1 : vector<1x128xf32> to vector<64x128xf32>
    %3 = arith.mulf %0, %2 : vector<64x128xf32>
    %4 = arith.truncf %3 : vector<64x128xf32> to vector<64x128xbf16>
    %c0_3 = arith.constant 0 : index
    %c0_4 = arith.constant 0 : index
    %5 = vector.load %arg3[%c0_3, %c0_4] : memref<128x256xbf16, #tpu.memory_space<vmem>>, vector<128x256xbf16>
    %cst = arith.constant dense<0.000000e+00> : vector<64x256xf32>
    %6 = tpu.matmul %4, %5, %cst {dimension_numbers = #tpu.dot_dimension_numbers<[1], [0], [0], [1], [0, 0, 1, 1], [], []>} : vector<64x128xbf16>, vector<128x256xbf16>, vector<64x256xf32> -> vector<64x256xf32>
    %7 = vector.extract_strided_slice %6 {offsets = [0, 0], sizes = [64, 128], strides = [1, 1]} : vector<64x256xf32> to vector<64x128xf32>
    %8 = vector.extract_strided_slice %6 {offsets = [0, 128], sizes = [64, 128], strides = [1, 1]} : vector<64x256xf32> to vector<64x128xf32>
    %9 = arith.mulf %7, %7 : vector<64x128xf32>
    %10 = arith.mulf %8, %8 : vector<64x128xf32>
    %11 = arith.addf %9, %10 : vector<64x128xf32>
    %12 = arith.truncf %11 : vector<64x128xf32> to vector<64x128xbf16>
    %c0_5 = arith.constant 0 : index
    %c0_6 = arith.constant 0 : index
    %13 = vector.load %arg4[%c0_5, %c0_6] : memref<128x128xbf16, #tpu.memory_space<vmem>>, vector<128x128xbf16>
    %cst_7 = arith.constant dense<0.000000e+00> : vector<64x128xf32>
    %14 = tpu.matmul %12, %13, %cst_7 {dimension_numbers = #tpu.dot_dimension_numbers<[1], [0], [0], [1], [0, 0, 1, 1], [], []>} : vector<64x128xbf16>, vector<128x128xbf16>, vector<64x128xf32> -> vector<64x128xf32>
    %cst_8 = arith.constant 9.99999974E-6 : f32
    %15 = vector.broadcast %cst_8 : f32 to vector<64x128xf32>
    %16 = arith.maximumf %14, %15 : vector<64x128xf32>
    %17 = math.log %16 : vector<64x128xf32>
    %18 = arith.truncf %17 : vector<64x128xf32> to vector<64x128xbf16>
    %c0_9 = arith.constant 0 : index
    %c0_10 = arith.constant 0 : index
    %19 = vector.load %arg5[%c0_9, %c0_10] : memref<128x128xbf16, #tpu.memory_space<vmem>>, vector<128x128xbf16>
    %cst_11 = arith.constant dense<0.000000e+00> : vector<64x128xf32>
    %20 = tpu.matmul %18, %19, %cst_11 {dimension_numbers = #tpu.dot_dimension_numbers<[1], [0], [0], [1], [0, 0, 1, 1], [], []>} : vector<64x128xbf16>, vector<128x128xbf16>, vector<64x128xf32> -> vector<64x128xf32>
    %c0_12 = arith.constant 0 : index
    %c0_13 = arith.constant 0 : index
    %21 = vector.load %arg6[%c0_12, %c0_13] : memref<1x128xf32, #tpu.memory_space<vmem>>, vector<1x128xf32>
    %22 = vector.broadcast %21 : vector<1x128xf32> to vector<64x128xf32>
    %23 = arith.addf %20, %22 : vector<64x128xf32>
    %c0_14 = arith.constant 0 : index
    %c0_15 = arith.constant 0 : index
    %24 = vector.load %arg7[%c0_14, %c0_15] : memref<64x128xf32, #tpu.memory_space<vmem>>, vector<64x128xf32>
    tpu.vector_store %arg7[%c0_14, %c0_15], %23 {strides = array<i32>} : memref<64x128xf32, #tpu.memory_space<vmem>>, vector<64x128xf32>,
    return
  }
  func.func @transform_0(%arg0: i32) -> (i32, i32) {
    %c0_i32 = arith.constant 0 : i32
    %c0_i32_0 = arith.constant 0 : i32
    return %arg0, %c0_i32 : i32, i32
  }
  func.func @transform_1(%arg0: i32) -> (i32, i32) {
    %c0_i32 = arith.constant 0 : i32
    %c0_i32_0 = arith.constant 0 : i32
    %c0_i32_1 = arith.constant 0 : i32
    return %c0_i32, %c0_i32_0 : i32, i32
  }
  func.func @transform_2(%arg0: i32) -> (i32, i32) {
    %c0_i32 = arith.constant 0 : i32
    %c0_i32_0 = arith.constant 0 : i32
    %c0_i32_1 = arith.constant 0 : i32
    return %c0_i32, %c0_i32_0 : i32, i32
  }
  func.func @transform_3(%arg0: i32) -> (i32, i32) {
    %c0_i32 = arith.constant 0 : i32
    %c0_i32_0 = arith.constant 0 : i32
    %c0_i32_1 = arith.constant 0 : i32
    return %c0_i32, %c0_i32_0 : i32, i32
  }
  func.func @transform_4(%arg0: i32) -> (i32, i32) {
    %c0_i32 = arith.constant 0 : i32
    %c0_i32_0 = arith.constant 0 : i32
    %c0_i32_1 = arith.constant 0 : i32
    return %c0_i32, %c0_i32_0 : i32, i32
  }
  func.func @transform_5(%arg0: i32) -> (i32, i32) {
    %c0_i32 = arith.constant 0 : i32
    %c0_i32_0 = arith.constant 0 : i32
    %c0_i32_1 = arith.constant 0 : i32
    return %c0_i32, %c0_i32_0 : i32, i32
  }
  func.func @transform_6(%arg0: i32) -> (i32, i32) {
    %c0_i32 = arith.constant 0 : i32
    %c0_i32_0 = arith.constant 0 : i32
    return %arg0, %c0_i32 : i32, i32
  }
}

</mosaic_0001>

<llo_original>
// kernel: tpu_custom_call.1
$region0: #{tpu_custom_call.1}
  #allocation0 [shape = 'u32[]', space=smem, size = 0x4, offset = 0x4, fixed_abs, tag = 'smem constant byte address 0x4 - core index']
  #allocation1 [shape = 'u32[144,128]{1,0:T(1,128)}', space=vmem, size = 0x12000, scoped, tag = 'internal scratch']
  %s0 = inlined_call_operand.hbm [shape: f32[64,128], index: 0, kind: input, shape index: {}]
  %s1 = inlined_call_operand.vmem [shape: f32[1,128], index: 1, kind: input, shape index: {}]
  %s2 = inlined_call_operand.hbm [shape: bf16[128,256], index: 2, kind: input, shape index: {}]
  %s3 = inlined_call_operand.hbm [shape: bf16[128,128], index: 3, kind: input, shape index: {}]
  %s4 = inlined_call_operand.hbm [shape: bf16[128,128], index: 4, kind: input, shape index: {}]
  %s5 = inlined_call_operand.vmem [shape: f32[1,128], index: 5, kind: input, shape index: {}]
  %s6 = inlined_call_operand.hbm [shape: f32[64,128], index: 6, kind: output, shape index: {}]
  %s7 = sld [smem:[#allocation0]]
  $region50: #{tpu_custom_call.1} parent=0
    _
  %s9 = ssub.s32 1, %s7
  %s10 = scalar_select 0, %s9, %s7
  $region1: #{tpu_custom_call.1} parent=0
    #allocation2 [shape = 'u8[32768]{0}', space=vmem, size = 0x8000, scoped, tag = 'input window, operand 0, single buffered']
    #allocation3 [shape = 's32[1]{0}', space=sflag, size = 0x4, scoped, tag = 'scoped memory for tpu_custom_call.1']
    #allocation4 [shape = 's32[1]{0}', space=sflag, size = 0x4, scoped, tag = 'scoped memory for tpu_custom_call.1']
    #allocation5 [shape = 'u8[65536]{0}', space=vmem, size = 0x10000, scoped, tag = 'input window, operand 2, single buffered']
    #allocation6 [shape = 's32[1]{0}', space=sflag, size = 0x4, scoped, tag = 'scoped memory for tpu_custom_call.1']
    #allocation7 [shape = 'u8[32768]{0}', space=vmem, size = 0x8000, scoped, tag = 'input window, operand 3, single buffered']
    #allocation8 [shape = 'u8[32768]{0}', space=vmem, size = 0x8000, scoped, tag = 'input window, operand 4, single buffered']
    #allocation9 [shape = 's32[1]{0}', space=sflag, size = 0x4, scoped, tag = 'scoped memory for tpu_custom_call.1']
    #allocation10 [shape = 'u8[32768]{0}', space=vmem, size = 0x8000, scoped, tag = 'output window, operand 0, single buffered']
    %11 = vsyncpa [#allocation3], 0
    %12 = vsyncpa [#allocation6], 0
    %13 = vsyncpa [#allocation9], 0
    %14 = vsyncpa [#allocation4], 0
    // Predicated region
    $region2: #{tpu_custom_call.1} parent=1 // pred_check
      _
    $region3: #{tpu_custom_call.1} parent=1 // pred_check_branch
      %16 = sbr.rel (0) target = $region5
    $region4: #{tpu_custom_call.1} parent=1 // pred_region
      %s18 = ssub.s32 1024, 1024
      %19 = vsyncadd [#allocation3], %s18
      %s20 = sshll.u32 [#allocation2], 4
      %s21 = int_to_ptr.vmem [resolvable:$true] %s20
      %26 = dma.hbm_to_vmem [thread:$0]  %s0, 1024, %s21, [#allocation3], 128, 128, 8
    $region5: #{tpu_custom_call.1} parent=1 // pred_fallthru
      _
    // Predicated region
    $region6: #{tpu_custom_call.1} parent=1 // pred_check
      _
    $region7: #{tpu_custom_call.1} parent=1 // pred_check_branch
      %28 = sbr.rel (0) target = $region9
    $region8: #{tpu_custom_call.1} parent=1 // pred_region
      _
    $region9: #{tpu_custom_call.1} parent=1 // pred_fallthru
      _
    // Predicated region
    $region10: #{tpu_custom_call.1} parent=1 // pred_check
      _
    $region11: #{tpu_custom_call.1} parent=1 // pred_check_branch
      %30 = sbr.rel (0) target = $region13
    $region12: #{tpu_custom_call.1} parent=1 // pred_region
      %s32 = ssub.s32 2048, 2048
      %33 = vsyncadd [#allocation6], %s32
      %s34 = sshll.u32 [#allocation5], 4
      %s35 = int_to_ptr.vmem [resolvable:$true] %s34
      %40 = dma.hbm_to_vmem [thread:$0]  %s2, 2048, %s35, [#allocation6], 128, 128, 8
    $region13: #{tpu_custom_call.1} parent=1 // pred_fallthru
      _
    // Predicated region
    $region14: #{tpu_custom_call.1} parent=1 // pred_check
      _
    $region15: #{tpu_custom_call.1} parent=1 // pred_check_branch
      %42 = sbr.rel (0) target = $region17
    $region16: #{tpu_custom_call.1} parent=1 // pred_region
      %s44 = ssub.s32 1024, 1024
      %45 = vsyncadd [#allocation6], %s44
      %s46 = sshll.u32 [#allocation7], 4
      %s47 = int_to_ptr.vmem [resolvable:$true] %s46
      %52 = dma.hbm_to_vmem [thread:$0]  %s3, 1024, %s47, [#allocation6], 64, 64, 4
    $region17: #{tpu_custom_call.1} parent=1 // pred_fallthru
      _
    // Predicated region
    $region18: #{tpu_custom_call.1} parent=1 // pred_check
      _
    $region19: #{tpu_custom_call.1} parent=1 // pred_check_branch
      %54 = sbr.rel (0) target = $region21
    $region20: #{tpu_custom_call.1} parent=1 // pred_region
      %s56 = ssub.s32 1024, 1024
      %57 = vsyncadd [#allocation9], %s56
      %s58 = sshll.u32 [#allocation8], 4
      %s59 = int_to_ptr.vmem [resolvable:$true] %s58
      %64 = dma.hbm_to_vmem [thread:$0]  %s4, 1024, %s59, [#allocation9], 64, 64, 4
    $region21: #{tpu_custom_call.1} parent=1 // pred_fallthru
      _
    // Predicated region
    $region22: #{tpu_custom_call.1} parent=1 // pred_check
      _
    $region23: #{tpu_custom_call.1} parent=1 // pred_check_branch
      %66 = sbr.rel (0) target = $region25
    $region24: #{tpu_custom_call.1} parent=1 // pred_region
      _
    $region25: #{tpu_custom_call.1} parent=1 // pred_fallthru
      _
    // Predicated region
    $region26: #{tpu_custom_call.1} parent=1 // pred_check
      _
    $region27: #{tpu_custom_call.1} parent=1 // pred_check_branch
      %68 = sbr.rel (0) target = $region29
    $region28: #{tpu_custom_call.1} parent=1 // pred_region
      %69 = dma.done [#allocation3], 1024
    $region29: #{tpu_custom_call.1} parent=1 // pred_fallthru
      _
    // Predicated region
    $region30: #{tpu_custom_call.1} parent=1 // pred_check
      _
    $region31: #{tpu_custom_call.1} parent=1 // pred_check_branch
      %71 = sbr.rel (0) target = $region33
    $region32: #{tpu_custom_call.1} parent=1 // pred_region
      %72 = dma.done [#allocation6], 2048
    $region33: #{tpu_custom_call.1} parent=1 // pred_fallthru
      _
    // Predicated region
    $region34: #{tpu_custom_call.1} parent=1 // pred_check
      _
    $region35: #{tpu_custom_call.1} parent=1 // pred_check_branch
      %74 = sbr.rel (0) target = $region37
    $region36: #{tpu_custom_call.1} parent=1 // pred_region
      %75 = dma.done [#allocation6], 1024
    $region37: #{tpu_custom_call.1} parent=1 // pred_fallthru
      _
    // Predicated region
    $region38: #{tpu_custom_call.1} parent=1 // pred_check
      _
    $region39: #{tpu_custom_call.1} parent=1 // pred_check_branch
      %77 = sbr.rel (0) target = $region41
    $region40: #{tpu_custom_call.1} parent=1 // pred_region
      %78 = dma.done [#allocation9], 1024
    $region41: #{tpu_custom_call.1} parent=1 // pred_fallthru
      _
    %v80 = vld [vmem:[#allocation2] sm:$0xff]
    %v81 = vld [vmem:[#allocation2 + $0x8] sm:$0xff]
    %v82 = vld [vmem:[#allocation2 + $0x10] sm:$0xff]
    %v83 = vld [vmem:[#allocation2 + $0x18] sm:$0xff]
    %v84 = vld [vmem:[#allocation2 + $0x20] sm:$0xff]
    %v85 = vld [vmem:[#allocation2 + $0x28] sm:$0xff]
    %v86 = vld [vmem:[#allocation2 + $0x30] sm:$0xff]
    %v87 = vld [vmem:[#allocation2 + $0x38] sm:$0xff]
    %v88 = vld [vmem:[%s1] sm:$0x1]
    %v90 = vlaneseq
    %v91 = vshrl.u32 %v90, 7
    %v92 = vsub.s32 0, %v91
    %v93 = vrot.slane %v88, %v92
    %v95 = vmul.f32 %v80, %v93
    %v96 = vmul.f32 %v81, %v93
    %v97 = vmul.f32 %v82, %v93
    %v98 = vmul.f32 %v83, %v93
    %v99 = vmul.f32 %v84, %v93
    %v100 = vmul.f32 %v85, %v93
    %v101 = vmul.f32 %v86, %v93
    %v102 = vmul.f32 %v87, %v93
    %v103 = vpack.c.bf16 %v96, %v95
    %v104 = vpack.c.bf16 %v98, %v97
    %v105 = vpack.c.bf16 %v100, %v99
    %v106 = vpack.c.bf16 %v102, %v101
    %v107 = vld [vmem:[#allocation5] sm:$0xff]
    %v108 = vld [vmem:[#allocation5 + $0x8] sm:$0xff]
    %v109 = vld [vmem:[#allocation5 + $0x10] sm:$0xff]
    %v110 = vld [vmem:[#allocation5 + $0x18] sm:$0xff]
    %v111 = vld [vmem:[#allocation5 + $0x20] sm:$0xff]
    %v112 = vld [vmem:[#allocation5 + $0x28] sm:$0xff]
    %v113 = vld [vmem:[#allocation5 + $0x30] sm:$0xff]
    %v114 = vld [vmem:[#allocation5 + $0x38] sm:$0xff]
    %v115 = vld [vmem:[#allocation5 + $0x40] sm:$0xff]
    %v116 = vld [vmem:[#allocation5 + $0x48] sm:$0xff]
    %v117 = vld [vmem:[#allocation5 + $0x50] sm:$0xff]
    %v118 = vld [vmem:[#allocation5 + $0x58] sm:$0xff]
    %v119 = vld [vmem:[#allocation5 + $0x60] sm:$0xff]
    %v120 = vld [vmem:[#allocation5 + $0x68] sm:$0xff]
    %v121 = vld [vmem:[#allocation5 + $0x70] sm:$0xff]
    %v122 = vld [vmem:[#allocation5 + $0x78] sm:$0xff]
    %v139 = vunpack.c.l.b16 %v107
    %v140 = vunpack.c.h.b16 %v107
    %v141 = vunpack.c.l.b16 %v108
    %v142 = vunpack.c.h.b16 %v108
    %v143 = vunpack.c.l.b16 %v109
    %v144 = vunpack.c.h.b16 %v109
    %v145 = vunpack.c.l.b16 %v110
    %v146 = vunpack.c.h.b16 %v110
    %v147 = vunpack.c.l.b16 %v111
    %v148 = vunpack.c.h.b16 %v111
    %v149 = vunpack.c.l.b16 %v112
    %v150 = vunpack.c.h.b16 %v112
    %v151 = vunpack.c.l.b16 %v113
    %v152 = vunpack.c.h.b16 %v113
    %v153 = vunpack.c.l.b16 %v114
    %v154 = vunpack.c.h.b16 %v114
    %v155 = vunpack.c.l.b16 %v115
    %v156 = vunpack.c.h.b16 %v115
    %v157 = vunpack.c.l.b16 %v116
    %v158 = vunpack.c.h.b16 %v116
    %v159 = vunpack.c.l.b16 %v117
    %v160 = vunpack.c.h.b16 %v117
    %v161 = vunpack.c.l.b16 %v118
    %v162 = vunpack.c.h.b16 %v118
    %v163 = vunpack.c.l.b16 %v119
    %v164 = vunpack.c.h.b16 %v119
    %v165 = vunpack.c.l.b16 %v120
    %v166 = vunpack.c.h.b16 %v120
    %v167 = vunpack.c.l.b16 %v121
    %v168 = vunpack.c.h.b16 %v121
    %v169 = vunpack.c.l.b16 %v122
    %v170 = vunpack.c.h.b16 %v122
    %v171 = vpack.c.b16 %v141, %v139
    %v172 = vpack.c.b16 %v142, %v140
    %v173 = vpack.c.b16 %v145, %v143
    %v174 = vpack.c.b16 %v146, %v144
    %v175 = vpack.c.b16 %v149, %v147
    %v176 = vpack.c.b16 %v150, %v148
    %v177 = vpack.c.b16 %v153, %v151
    %v178 = vpack.c.b16 %v154, %v152
    %v179 = vpack.c.b16 %v157, %v155
    %v180 = vpack.c.b16 %v158, %v156
    %v181 = vpack.c.b16 %v161, %v159
    %v182 = vpack.c.b16 %v162, %v160
    %v183 = vpack.c.b16 %v165, %v163
    %v184 = vpack.c.b16 %v166, %v164
    %v185 = vpack.c.b16 %v169, %v167
    %v186 = vpack.c.b16 %v170, %v168
    %203 = vmatprep.subr.bf16.mxu0 %v172
    %204 = vmatpush1.bf16.msra.mxu0 %v171
    %205 = vmatprep.subr.bf16.mxu0 %v174
    %206 = vmatpush1.bf16.msra.mxu0 %v173
    %207 = vmatprep.subr.bf16.mxu0 %v176
    %208 = vmatpush1.bf16.msra.mxu0 %v175
    %209 = vmatprep.subr.bf16.mxu0 %v178
    %210 = vmatpush1.bf16.msra.mxu0 %v177
    %211 = vmatprep.subr.bf16.mxu0 %v180
    %212 = vmatpush1.bf16.msra.mxu0 %v179
    %213 = vmatprep.subr.bf16.mxu0 %v182
    %214 = vmatpush1.bf16.msra.mxu0 %v181
    %215 = vmatprep.subr.bf16.mxu0 %v184
    %216 = vmatpush1.bf16.msra.mxu0 %v183
    %217 = vmatprep.subr.bf16.mxu0 %v186
    %218 = vmatpush1.bf16.msra.mxu0 %v185
    %219 = vmatprep.subr.bf16.mxu0 0
    %220 = vmatpush1.bf16.msra.mxu0 0
    %221 = vmatprep.subr.bf16.mxu0 0
    %222 = vmatpush1.bf16.msra.mxu0 0
    %223 = vmatprep.subr.bf16.mxu0 0
    %224 = vmatpush1.bf16.msra.mxu0 0
    %225 = vmatprep.subr.bf16.mxu0 0
    %226 = vmatpush1.bf16.msra.mxu0 0
    %227 = vmatprep.subr.bf16.mxu0 0
    %228 = vmatpush1.bf16.msra.mxu0 0
    %229 = vmatprep.subr.bf16.mxu0 0
    %230 = vmatpush1.bf16.msra.mxu0 0
    %231 = vmatprep.subr.bf16.mxu0 0
    %232 = vmatpush1.bf16.msra.mxu0 0
    %233 = vmatprep.subr.bf16.mxu0 0
    %234 = vmatpush1.bf16.msra.mxu0 0
    %235 = vmatprep.mubr.bf16.mxu0 0
    %236 = vmatmul.mubr.bf16.gmra.mrb[0].mxu0 %v103
    %v237 = vpop.f32.mrb[0].mxu0
    %v238 = vadd.f32 0.0, %v237
    %v239 = vpop.f32.mrb[0].mxu0
    %v240 = vadd.f32 0.0, %v239
    %v241 = vpop.f32.mrb[0].mxu0
    %v242 = vadd.f32 0.0, %v241
    %v243 = vpop.f32.mrb[0].mxu0
    %v244 = vadd.f32 0.0, %v243
    %245 = vmatprep.mubr.bf16.mxu0 0
    %246 = vmatmul.mubr.bf16.gmra.mrb[0].mxu0 %v104
    %v247 = vpop.f32.mrb[0].mxu0
    %v248 = vadd.f32 0.0, %v247
    %v249 = vpop.f32.mrb[0].mxu0
    %v250 = vadd.f32 0.0, %v249
    %v251 = vpop.f32.mrb[0].mxu0
    %v252 = vadd.f32 0.0, %v251
    %v253 = vpop.f32.mrb[0].mxu0
    %v254 = vadd.f32 0.0, %v253
    %255 = vmatprep.mubr.bf16.mxu0 0
    %256 = vmatmul.mubr.bf16.gmra.mrb[0].mxu0 %v105
    %v257 = vpop.f32.mrb[0].mxu0
    %v258 = vadd.f32 0.0, %v257
    %v259 = vpop.f32.mrb[0].mxu0
    %v260 = vadd.f32 0.0, %v259
    %v261 = vpop.f32.mrb[0].mxu0
    %v262 = vadd.f32 0.0, %v261
    %v263 = vpop.f32.mrb[0].mxu0
    %v264 = vadd.f32 0.0, %v263
    %265 = vmatprep.mubr.bf16.mxu0 0
    %266 = vmatmul.mubr.bf16.gmra.mrb[0].mxu0 %v106
    %v267 = vpop.f32.mrb[0].mxu0
    %v268 = vadd.f32 0.0, %v267
    %v269 = vpop.f32.mrb[0].mxu0
    %v270 = vadd.f32 0.0, %v269
    %v271 = vpop.f32.mrb[0].mxu0
    %v272 = vadd.f32 0.0, %v271
    %v273 = vpop.f32.mrb[0].mxu0
    %v274 = vadd.f32 0.0, %v273
    %275 = vdwg.mxu0
    %v276 = vmul.f32 %v238, %v238
    %v277 = vmul.f32 %v242, %v242
    %v278 = vmul.f32 %v248, %v248
    %v279 = vmul.f32 %v252, %v252
    %v280 = vmul.f32 %v258, %v258
    %v281 = vmul.f32 %v262, %v262
    %v282 = vmul.f32 %v268, %v268
    %v283 = vmul.f32 %v272, %v272
    %v284 = vmul.f32 %v240, %v240
    %v285 = vmul.f32 %v244, %v244
    %v286 = vmul.f32 %v250, %v250
    %v287 = vmul.f32 %v254, %v254
    %v288 = vmul.f32 %v260, %v260
    %v289 = vmul.f32 %v264, %v264
    %v290 = vmul.f32 %v270, %v270
    %v291 = vmul.f32 %v274, %v274
    %v292 = vadd.f32 %v276, %v284
    %v293 = vadd.f32 %v277, %v285
    %v294 = vadd.f32 %v278, %v286
    %v295 = vadd.f32 %v279, %v287
    %v296 = vadd.f32 %v280, %v288
    %v297 = vadd.f32 %v281, %v289
    %v298 = vadd.f32 %v282, %v290
    %v299 = vadd.f32 %v283, %v291
    %v300 = vpack.c.bf16 %v293, %v292
    %v301 = vpack.c.bf16 %v295, %v294
    %v302 = vpack.c.bf16 %v297, %v296
    %v303 = vpack.c.bf16 %v299, %v298
    %v304 = vld [vmem:[#allocation7] sm:$0xf]
    %v305 = vld [vmem:[#allocation7 + $0x4] sm:$0xf]
    %v306 = vld [vmem:[#allocation7 + $0x8] sm:$0xf]
    %v307 = vld [vmem:[#allocation7 + $0xc] sm:$0xf]
    %v308 = vld [vmem:[#allocation7 + $0x10] sm:$0xf]
    %v309 = vld [vmem:[#allocation7 + $0x14] sm:$0xf]
    %v310 = vld [vmem:[#allocation7 + $0x18] sm:$0xf]
    %v311 = vld [vmem:[#allocation7 + $0x1c] sm:$0xf]
    %v312 = vld [vmem:[#allocation7 + $0x20] sm:$0xf]
    %v313 = vld [vmem:[#allocation7 + $0x24] sm:$0xf]
    %v314 = vld [vmem:[#allocation7 + $0x28] sm:$0xf]
    %v315 = vld [vmem:[#allocation7 + $0x2c] sm:$0xf]
    %v316 = vld [vmem:[#allocation7 + $0x30] sm:$0xf]
    %v317 = vld [vmem:[#allocation7 + $0x34] sm:$0xf]
    %v318 = vld [vmem:[#allocation7 + $0x38] sm:$0xf]
    %v319 = vld [vmem:[#allocation7 + $0x3c] sm:$0xf]
    %v336 = vunpack.c.l.b16 %v304
    %v337 = vunpack.c.l.b16 %v305
    %v338 = vunpack.c.l.b16 %v306
    %v339 = vunpack.c.l.b16 %v307
    %v340 = vunpack.c.l.b16 %v308
    %v341 = vunpack.c.l.b16 %v309
    %v342 = vunpack.c.l.b16 %v310
    %v343 = vunpack.c.l.b16 %v311
    %v344 = vunpack.c.l.b16 %v312
    %v345 = vunpack.c.l.b16 %v313
    %v346 = vunpack.c.l.b16 %v314
    %v347 = vunpack.c.l.b16 %v315
    %v348 = vunpack.c.l.b16 %v316
    %v349 = vunpack.c.l.b16 %v317
    %v350 = vunpack.c.l.b16 %v318
    %v351 = vunpack.c.l.b16 %v319
    %v352 = vpack.c.b16 %v337, %v336
    %v353 = vpack.c.b16 %v339, %v338
    %v354 = vpack.c.b16 %v341, %v340
    %v355 = vpack.c.b16 %v343, %v342
    %v356 = vpack.c.b16 %v345, %v344
    %v357 = vpack.c.b16 %v347, %v346
    %v358 = vpack.c.b16 %v349, %v348
    %v359 = vpack.c.b16 %v351, %v350
    %368 = vmatprep.subr.bf16.mxu0 0
    %369 = vmatpush1.bf16.msra.mxu0 %v352
    %370 = vmatprep.subr.bf16.mxu0 0
    %371 = vmatpush1.bf16.msra.mxu0 %v353
    %372 = vmatprep.subr.bf16.mxu0 0
    %373 = vmatpush1.bf16.msra.mxu0 %v354
    %374 = vmatprep.subr.bf16.mxu0 0
    %375 = vmatpush1.bf16.msra.mxu0 %v355
    %376 = vmatprep.subr.bf16.mxu0 0
    %377 = vmatpush1.bf16.msra.mxu0 %v356
    %378 = vmatprep.subr.bf16.mxu0 0
    %379 = vmatpush1.bf16.msra.mxu0 %v357
    %380 = vmatprep.subr.bf16.mxu0 0
    %381 = vmatpush1.bf16.msra.mxu0 %v358
    %382 = vmatprep.subr.bf16.mxu0 0
    %383 = vmatpush1.bf16.msra.mxu0 %v359
    %384 = vmatprep.subr.bf16.mxu0 0
    %385 = vmatpush1.bf16.msra.mxu0 0
    %386 = vmatprep.subr.bf16.mxu0 0
    %387 = vmatpush1.bf16.msra.mxu0 0
    %388 = vmatprep.subr.bf16.mxu0 0
    %389 = vmatpush1.bf16.msra.mxu0 0
    %390 = vmatprep.subr.bf16.mxu0 0
    %391 = vmatpush1.bf16.msra.mxu0 0
    %392 = vmatprep.subr.bf16.mxu0 0
    %393 = vmatpush1.bf16.msra.mxu0 0
    %394 = vmatprep.subr.bf16.mxu0 0
    %395 = vmatpush1.bf16.msra.mxu0 0
    %396 = vmatprep.subr.bf16.mxu0 0
    %397 = vmatpush1.bf16.msra.mxu0 0
    %398 = vmatprep.subr.bf16.mxu0 0
    %399 = vmatpush1.bf16.msra.mxu0 0
    %400 = vmatprep.mubr.bf16.mxu0 0
    %401 = vmatmul.mubr.bf16.gmra.mrb[0].mxu0 %v300
    %v402 = vpop.f32.mrb[0].mxu0
    %v403 = vadd.f32 0.0, %v402
    %v404 = vpop.f32.mrb[0].mxu0
    %v405 = vpop.f32.mrb[0].mxu0
    %v406 = vadd.f32 0.0, %v405
    %v407 = vpop.f32.mrb[0].mxu0
    %408 = vmatprep.mubr.bf16.mxu0 0
    %409 = vmatmul.mubr.bf16.gmra.mrb[0].mxu0 %v301
    %v410 = vpop.f32.mrb[0].mxu0
    %v411 = vadd.f32 0.0, %v410
    %v412 = vpop.f32.mrb[0].mxu0
    %v413 = vpop.f32.mrb[0].mxu0
    %v414 = vadd.f32 0.0, %v413
    %v415 = vpop.f32.mrb[0].mxu0
    %416 = vmatprep.mubr.bf16.mxu0 0
    %417 = vmatmul.mubr.bf16.gmra.mrb[0].mxu0 %v302
    %v418 = vpop.f32.mrb[0].mxu0
    %v419 = vadd.f32 0.0, %v418
    %v420 = vpop.f32.mrb[0].mxu0
    %v421 = vpop.f32.mrb[0].mxu0
    %v422 = vadd.f32 0.0, %v421
    %v423 = vpop.f32.mrb[0].mxu0
    %424 = vmatprep.mubr.bf16.mxu0 0
    %425 = vmatmul.mubr.bf16.gmra.mrb[0].mxu0 %v303
    %v426 = vpop.f32.mrb[0].mxu0
    %v427 = vadd.f32 0.0, %v426
    %v428 = vpop.f32.mrb[0].mxu0
    %v429 = vpop.f32.mrb[0].mxu0
    %v430 = vadd.f32 0.0, %v429
    %v431 = vpop.f32.mrb[0].mxu0
    %432 = vdwg.mxu0
    %v433 = vmax.f32 %v403, 1e-05
    %v434 = vmax.f32 %v406, 1e-05
    %v435 = vmax.f32 %v411, 1e-05
    %v436 = vmax.f32 %v414, 1e-05
    %v437 = vmax.f32 %v419, 1e-05
    %v438 = vmax.f32 %v422, 1e-05
    %v439 = vmax.f32 %v427, 1e-05
    %v440 = vmax.f32 %v430, 1e-05
    %v441 = vlog2.pop %v433
    %v442 = vmul.f32 %v441, 0.6931472
    %v443 = vlog2.pop %v434
    %v444 = vmul.f32 %v443, 0.6931472
    %v445 = vlog2.pop %v435
    %v446 = vmul.f32 %v445, 0.6931472
    %v447 = vlog2.pop %v436
    %v448 = vmul.f32 %v447, 0.6931472
    %v449 = vlog2.pop %v437
    %v450 = vmul.f32 %v449, 0.6931472
    %v451 = vlog2.pop %v438
    %v452 = vmul.f32 %v451, 0.6931472
    %v453 = vlog2.pop %v439
    %v454 = vmul.f32 %v453, 0.6931472
    %v455 = vlog2.pop %v440
    %v456 = vmul.f32 %v455, 0.6931472
    %v457 = vpack.c.bf16 %v444, %v442
    %v458 = vpack.c.bf16 %v448, %v446
    %v459 = vpack.c.bf16 %v452, %v450
    %v460 = vpack.c.bf16 %v456, %v454
    %v461 = vld [vmem:[#allocation8] sm:$0xf]
    %v462 = vld [vmem:[#allocation8 + $0x4] sm:$0xf]
    %v463 = vld [vmem:[#allocation8 + $0x8] sm:$0xf]
    %v464 = vld [vmem:[#allocation8 + $0xc] sm:$0xf]
    %v465 = vld [vmem:[#allocation8 + $0x10] sm:$0xf]
    %v466 = vld [vmem:[#allocation8 + $0x14] sm:$0xf]
    %v467 = vld [vmem:[#allocation8 + $0x18] sm:$0xf]
    %v468 = vld [vmem:[#allocation8 + $0x1c] sm:$0xf]
    %v469 = vld [vmem:[#allocation8 + $0x20] sm:$0xf]
    %v470 = vld [vmem:[#allocation8 + $0x24] sm:$0xf]
    %v471 = vld [vmem:[#allocation8 + $0x28] sm:$0xf]
    %v472 = vld [vmem:[#allocation8 + $0x2c] sm:$0xf]
    %v473 = vld [vmem:[#allocation8 + $0x30] sm:$0xf]
    %v474 = vld [vmem:[#allocation8 + $0x34] sm:$0xf]
    %v475 = vld [vmem:[#allocation8 + $0x38] sm:$0xf]
    %v476 = vld [vmem:[#allocation8 + $0x3c] sm:$0xf]
    %v477 = vld [vmem:[%s5] sm:$0x1]
    %v479 = vlaneseq
    %v480 = vshrl.u32 %v479, 7
    %v481 = vsub.s32 0, %v480
    %v482 = vrot.slane %v477, %v481
    %v500 = vunpack.c.l.b16 %v461
    %v501 = vunpack.c.l.b16 %v462
    %v502 = vunpack.c.l.b16 %v463
    %v503 = vunpack.c.l.b16 %v464
    %v504 = vunpack.c.l.b16 %v465
    %v505 = vunpack.c.l.b16 %v466
    %v506 = vunpack.c.l.b16 %v467
    %v507 = vunpack.c.l.b16 %v468
    %v508 = vunpack.c.l.b16 %v469
    %v509 = vunpack.c.l.b16 %v470
    %v510 = vunpack.c.l.b16 %v471
    %v511 = vunpack.c.l.b16 %v472
    %v512 = vunpack.c.l.b16 %v473
    %v513 = vunpack.c.l.b16 %v474
    %v514 = vunpack.c.l.b16 %v475
    %v515 = vunpack.c.l.b16 %v476
    %v516 = vpack.c.b16 %v501, %v500
    %v517 = vpack.c.b16 %v503, %v502
    %v518 = vpack.c.b16 %v505, %v504
    %v519 = vpack.c.b16 %v507, %v506
    %v520 = vpack.c.b16 %v509, %v508
    %v521 = vpack.c.b16 %v511, %v510
    %v522 = vpack.c.b16 %v513, %v512
    %v523 = vpack.c.b16 %v515, %v514
    %532 = vmatprep.subr.bf16.mxu0 0
    %533 = vmatpush1.bf16.msra.mxu0 %v516
    %534 = vmatprep.subr.bf16.mxu0 0
    %535 = vmatpush1.bf16.msra.mxu0 %v517
    %536 = vmatprep.subr.bf16.mxu0 0
    %537 = vmatpush1.bf16.msra.mxu0 %v518
    %538 = vmatprep.subr.bf16.mxu0 0
    %539 = vmatpush1.bf16.msra.mxu0 %v519
    %540 = vmatprep.subr.bf16.mxu0 0
    %541 = vmatpush1.bf16.msra.mxu0 %v520
    %542 = vmatprep.subr.bf16.mxu0 0
    %543 = vmatpush1.bf16.msra.mxu0 %v521
    %544 = vmatprep.subr.bf16.mxu0 0
    %545 = vmatpush1.bf16.msra.mxu0 %v522
    %546 = vmatprep.subr.bf16.mxu0 0
    %547 = vmatpush1.bf16.msra.mxu0 %v523
    %548 = vmatprep.subr.bf16.mxu0 0
    %549 = vmatpush1.bf16.msra.mxu0 0
    %550 = vmatprep.subr.bf16.mxu0 0
    %551 = vmatpush1.bf16.msra.mxu0 0
    %552 = vmatprep.subr.bf16.mxu0 0
    %553 = vmatpush1.bf16.msra.mxu0 0
    %554 = vmatprep.subr.bf16.mxu0 0
    %555 = vmatpush1.bf16.msra.mxu0 0
    %556 = vmatprep.subr.bf16.mxu0 0
    %557 = vmatpush1.bf16.msra.mxu0 0
    %558 = vmatprep.subr.bf16.mxu0 0
    %559 = vmatpush1.bf16.msra.mxu0 0
    %560 = vmatprep.subr.bf16.mxu0 0
    %561 = vmatpush1.bf16.msra.mxu0 0
    %562 = vmatprep.subr.bf16.mxu0 0
    %563 = vmatpush1.bf16.msra.mxu0 0
    %564 = vmatprep.mubr.bf16.mxu0 0
    %565 = vmatmul.mubr.bf16.gmra.mrb[0].mxu0 %v457
    %v566 = vpop.f32.mrb[0].mxu0
    %v567 = vadd.f32 %v482, %v566
    %v568 = vpop.f32.mrb[0].mxu0
    %v569 = vpop.f32.mrb[0].mxu0
    %v570 = vadd.f32 %v482, %v569
    %v571 = vpop.f32.mrb[0].mxu0
    %572 = vmatprep.mubr.bf16.mxu0 0
    %573 = vmatmul.mubr.bf16.gmra.mrb[0].mxu0 %v458
    %v574 = vpop.f32.mrb[0].mxu0
    %v575 = vadd.f32 %v482, %v574
    %v576 = vpop.f32.mrb[0].mxu0
    %v577 = vpop.f32.mrb[0].mxu0
    %v578 = vadd.f32 %v482, %v577
    %v579 = vpop.f32.mrb[0].mxu0
    %580 = vmatprep.mubr.bf16.mxu0 0
    %581 = vmatmul.mubr.bf16.gmra.mrb[0].mxu0 %v459
    %v582 = vpop.f32.mrb[0].mxu0
    %v583 = vadd.f32 %v482, %v582
    %v584 = vpop.f32.mrb[0].mxu0
    %v585 = vpop.f32.mrb[0].mxu0
    %v586 = vadd.f32 %v482, %v585
    %v587 = vpop.f32.mrb[0].mxu0
    %588 = vmatprep.mubr.bf16.mxu0 0
    %589 = vmatmul.mubr.bf16.gmra.mrb[0].mxu0 %v460
    %v590 = vpop.f32.mrb[0].mxu0
    %v591 = vadd.f32 %v482, %v590
    %v592 = vpop.f32.mrb[0].mxu0
    %v593 = vpop.f32.mrb[0].mxu0
    %v594 = vadd.f32 %v482, %v593
    %v595 = vpop.f32.mrb[0].mxu0
    %596 = vdwg.mxu0
    %597 = vst [vmem:[#allocation10] sm:$0xff] %v567
    %598 = vst [vmem:[#allocation10 + $0x8] sm:$0xff] %v570
    %599 = vst [vmem:[#allocation10 + $0x10] sm:$0xff] %v575
    %600 = vst [vmem:[#allocation10 + $0x18] sm:$0xff] %v578
    %601 = vst [vmem:[#allocation10 + $0x20] sm:$0xff] %v583
    %602 = vst [vmem:[#allocation10 + $0x28] sm:$0xff] %v586
    %603 = vst [vmem:[#allocation10 + $0x30] sm:$0xff] %v591
    %604 = vst [vmem:[#allocation10 + $0x38] sm:$0xff] %v594
    // Predicated region
    $region42: #{tpu_custom_call.1} parent=1 // pred_check
      _
    $region43: #{tpu_custom_call.1} parent=1 // pred_check_branch
      %606 = sbr.rel (0) target = $region45
    $region44: #{tpu_custom_call.1} parent=1 // pred_region
      %s608 = ssub.s32 1024, 1024
      %609 = vsyncadd [#allocation4], %s608
      %s610 = sshll.u32 [#allocation10], 4
      %s611 = int_to_ptr.vmem [resolvable:$true] %s610
      %616 = dma.vmem_to_hbm [thread:$0]  %s611, 1024, %s6, [#allocation4], 128, 128, 8
    $region45: #{tpu_custom_call.1} parent=1 // pred_fallthru
      _
    // Predicated region
    $region46: #{tpu_custom_call.1} parent=1 // pred_check
      _
    $region47: #{tpu_custom_call.1} parent=1 // pred_check_branch
      %618 = sbr.rel (0) target = $region49
    $region48: #{tpu_custom_call.1} parent=1 // pred_region
      %619 = dma.done [#allocation4], 1024
    $region49: #{tpu_custom_call.1} parent=1 // pred_fallthru
      _
    %620 = vsyncpa [#allocation3], 1
    %621 = vsyncpa [#allocation6], 1
    %622 = vsyncpa [#allocation9], 1
    %623 = vsyncpa [#allocation4], 1

</llo_original>
